<compile_context>
chip_gen: v7x
topology: tpu7x:2x2x1
jax: 0.10.0
libtpu: 0.0.40
codegen_flags: <defaults>
</compile_context>

<pallas_src>
import functools

import jax
import jax.numpy as jnp
from jax.experimental import pallas as pl
from jax.experimental.pallas import tpu as pltpu


def _mlp_kernel(x_ref, w1_ref, b1_ref, w2_ref, b2_ref, w3t_ref, b3_ref, o_ref):
    """Fused 3-layer MLP over one (row_tile, D) tile of tokens.

    x_ref  : (tm, D) f32     w1_ref : (D, H) f32   b1_ref: (1, H) f32
    w2_ref : (H, H) bf16     b2_ref : (1, H) f32
    w3t_ref: (D, H) f32 (transposed W3: rows = output features)
    b3_ref : (1, D) f32      o_ref  : (tm, D) f32
    """
    tm, D = x_ref.shape
    H = w1_ref.shape[1]
    x = x_ref[...]                                      # (tm, D) f32

    # ---- Layer 1 (K = D is tiny): D broadcast-FMAs on the VPU, exact f32 ---
    h1 = x[:, 0:1] * w1_ref[0:1, :]
    for d in range(1, D):                               # static unroll, D = 4..8
        h1 = h1 + x[:, d:d + 1] * w1_ref[d:d + 1, :]
    h1 = jnp.maximum(h1 + b1_ref[...], 0.0)

    # ---- Layer 2 (H x H): the only MXU matmul, bf16 operands, f32 accum ----
    h2 = jnp.dot(h1.astype(jnp.bfloat16), w2_ref[...],
                 preferred_element_type=jnp.float32) + b2_ref[...]
    h2 = jnp.maximum(h2, 0.0)

    # ---- Layer 3 (N = D is tiny): VPU multiply + XLU lane-reduce per output -
    lane = jax.lax.broadcasted_iota(jnp.int32, (tm, D), 1)
    y = jnp.zeros((tm, D), jnp.float32)
    for d in range(D):
        col = jnp.sum(h2 * w3t_ref[d:d + 1, :], axis=-1, keepdims=True)
        y = y + jnp.where(lane == d, col, 0.0)
    o_ref[...] = (y + b3_ref[...]).astype(o_ref.dtype)


def _round_up(x, m):
    return ((x + m - 1) // m) * m


def _vmem_per_row_bytes(D, H):
    """Lane-padding-aware VMEM bytes per row of the pipelined working set."""
    dp = _round_up(D, 128)              # D-minor f32 blocks pad to 128 lanes
    hp = _round_up(H, 128)
    x_out = 2 * (2 * 4 * dp)            # x + out tiles, double-buffered, f32
    h1 = 4 * hp + 2 * hp                # h1 f32 + its bf16 copy fed to the MXU
    h2 = 4 * hp                         # h2 f32
    tmp = 2 * 4 * hp                    # layer-3 products / compiler temporaries
    return x_out + h1 + h2 + tmp


def _vmem_weight_bytes(D, H):
    dp = _round_up(D, 128)
    hp = _round_up(H, 128)
    ds = _round_up(D, 8)
    hs = _round_up(H, 8)
    w = (4 * ds * hp + 4 * hp           # W1 (D, H) f32 + b1
         + 2 * hs * hp + 4 * hp         # W2 (H, H) bf16 + b2
         + 4 * ds * hp + 4 * dp)        # W3^T (D, H) f32 + b3
    return 2 * w                        # double-buffered by the pipeline


def _choose_row_tile(M, D, H, tm_cap):
    """Row tile (multiple of 8) within a ~24 MiB VMEM budget (safe on v7x)."""
    if M <= 8:
        return M                        # block equal to the (tiny) full extent
    budget = 24 * 1024 * 1024
    fit = max(8, (budget - _vmem_weight_bytes(D, H)) // _vmem_per_row_bytes(D, H))
    row_tile = max(8, (min(tm_cap, int(fit)) // 8) * 8)
    row_tile = min(row_tile, _round_up(M, 8))
    # Keep >= 4 grid steps (>= 2 per TensorCore on v7x) when there is enough
    # work, so each core can still double-buffer its x DMA / output writeback.
    # Harmless on single-TC v5e / v6e.
    if M >= 32 and pl.cdiv(M, row_tile) < 4:
        row_tile = max(8, _round_up(pl.cdiv(M, 4), 8))
    return row_tile


@functools.partial(jax.jit, static_argnames=("tm",))
def score_network_forward(x, params, *, tm=2048):
    """x: (B, N, D) float32 -> (B, N, D) float32."""
    w1, b1, w2, b2, w3t, b3 = params
    B, N, D = x.shape
    H = w1.shape[1]
    M = B * N

    xf = x.reshape(M, D)                         # free reshape, no padding copy
    w2_bf16 = w2.astype(jnp.bfloat16)            # explicit native-rate MXU operand

    row_tile = _choose_row_tile(M, D, H, tm)
    grid = (pl.cdiv(M, row_tile),)

    vmem_need = row_tile * _vmem_per_row_bytes(D, H) + _vmem_weight_bytes(D, H)
    vmem_limit = int(min(max(2 * vmem_need, 24 * 1024 * 1024), 48 * 1024 * 1024))

    flops = 2 * M * (D * H + H * H + H * D)
    bytes_accessed = 4 * (2 * M * D + 2 * D * H + 2 * H + D) + 2 * H * H

    out = pl.pallas_call(
        _mlp_kernel,
        out_shape=jax.ShapeDtypeStruct((M, D), x.dtype),
        grid=grid,
        in_specs=[
            pl.BlockSpec((row_tile, D), lambda i: (i, 0)),  # x tile
            pl.BlockSpec((D, H), lambda i: (0, 0)),          # W1 (resident)
            pl.BlockSpec((1, H), lambda i: (0, 0)),          # b1
            pl.BlockSpec((H, H), lambda i: (0, 0)),          # W2 bf16 (resident)
            pl.BlockSpec((1, H), lambda i: (0, 0)),          # b2
            pl.BlockSpec((D, H), lambda i: (0, 0)),          # W3^T (resident)
            pl.BlockSpec((1, D), lambda i: (0, 0)),          # b3
        ],
        out_specs=pl.BlockSpec((row_tile, D), lambda i: (i, 0)),
        compiler_params=pltpu.CompilerParams(
            dimension_semantics=("parallel",),
            vmem_limit_bytes=vmem_limit,
        ),
        cost_estimate=pl.CostEstimate(
            flops=flops, transcendentals=0, bytes_accessed=bytes_accessed
        ),
    )(xf, w1, b1, w2_bf16, b2, w3t, b3)

    return out.reshape(B, N, D)


def init_score_network_params(key, dim, hidden_dim=128, dtype=jnp.float32):
    """Mimics nn.Linear's U(-1/sqrt(fan_in), 1/sqrt(fan_in)) init.

    W1, W2 are stored (in, out) so the kernel computes x @ W + b; W3 is stored
    transposed, (out=dim, in=hidden), so the kernel can slice whole sublane
    rows for the per-output-lane reductions of layer 3."""
    ks = jax.random.split(key, 6)

    def uniform(k, shape, fan_in):
        bound = 1.0 / jnp.sqrt(fan_in)
        return jax.random.uniform(k, shape, dtype, -bound, bound)

    w1 = uniform(ks[0], (dim, hidden_dim), dim)
    b1 = uniform(ks[1], (1, hidden_dim), dim)
    w2 = uniform(ks[2], (hidden_dim, hidden_dim), hidden_dim)
    b2 = uniform(ks[3], (1, hidden_dim), hidden_dim)
    w3t = uniform(ks[4], (dim, hidden_dim), hidden_dim)   # (out, in) layout
    b3 = uniform(ks[5], (1, dim), hidden_dim)
    return (w1, b1, w2, b2, w3t, b3)


def _reference_forward(x, params):
    w1, b1, w2, b2, w3t, b3 = params
    B, N, D = x.shape
    h = x.reshape(B * N, D)
    h = jnp.maximum(h @ w1 + b1, 0.0)
    h = jnp.maximum(h @ w2 + b2, 0.0)
    h = h @ w3t.T + b3
    return h.reshape(B, N, D)


if __name__ == "__main__":
    key = jax.random.PRNGKey(0)
    kx, kp, kx2, kp2 = jax.random.split(key, 4)

    # Case 1: small shapes consistent with the module's (B, N, D) forward.
    B, N, D, HIDDEN = 2, 8, 4, 32
    x = jax.random.normal(kx, (B, N, D), dtype=jnp.float32)
    params = init_score_network_params(kp, D, HIDDEN)
    out = jax.block_until_ready(score_network_forward(x, params))
    ref = _reference_forward(x, params)
    assert out.shape == (B, N, D)
    assert jnp.allclose(out, ref, atol=2e-2, rtol=2e-2), "case 1 mismatch"

    # Case 2: default hidden_dim=128 and a row count that does not divide the
    # row tile (exercises the clipped ragged last block and >=4 grid steps).
    B2, N2, D2 = 3, 33, 8
    x2 = jax.random.normal(kx2, (B2, N2, D2), dtype=jnp.float32)
    params2 = init_score_network_params(kp2, D2, 128)
    out2 = jax.block_until_ready(score_network_forward(x2, params2))
    ref2 = _reference_forward(x2, params2)
    assert out2.shape == (B2, N2, D2)
    assert jnp.allclose(out2, ref2, atol=2e-2, rtol=2e-2), "case 2 mismatch"

    print("KERNEL_OK")
</pallas_src>

<mosaic_0001>
module attributes {stable_mosaic.version = 11 : i64} {
  func.func @_mlp_kernel(%arg0: i32, %arg1: memref<16x4xf32, #tpu.memory_space<vmem>>, %arg2: memref<4x32xf32, #tpu.memory_space<vmem>>, %arg3: memref<1x32xf32, #tpu.memory_space<vmem>>, %arg4: memref<32x32xbf16, #tpu.memory_space<vmem>>, %arg5: memref<1x32xf32, #tpu.memory_space<vmem>>, %arg6: memref<4x32xf32, #tpu.memory_space<vmem>>, %arg7: memref<1x4xf32, #tpu.memory_space<vmem>>, %arg8: memref<16x4xf32, #tpu.memory_space<vmem>>) attributes {dimension_semantics = [#tpu.dimension_semantics<parallel>], iteration_bounds = array<i64: 1>, scalar_prefetch = 0 : i64, scratch_operands = 0 : i64, tpu.core_type = #tpu.core_type<tc>, window_params = [{transform_indices = @transform_0, window_bounds = array<i64: 16, 4>}, {pipeline_mode = #tpu.pipeline_mode<synchronous>, transform_indices = @transform_1, window_bounds = array<i64: 4, 32>}, {pipeline_mode = #tpu.pipeline_mode<synchronous>, transform_indices = @transform_2, window_bounds = array<i64: 1, 32>}, {pipeline_mode = #tpu.pipeline_mode<synchronous>, transform_indices = @transform_3, window_bounds = array<i64: 32, 32>}, {pipeline_mode = #tpu.pipeline_mode<synchronous>, transform_indices = @transform_4, window_bounds = array<i64: 1, 32>}, {pipeline_mode = #tpu.pipeline_mode<synchronous>, transform_indices = @transform_5, window_bounds = array<i64: 4, 32>}, {pipeline_mode = #tpu.pipeline_mode<synchronous>, transform_indices = @transform_6, window_bounds = array<i64: 1, 4>}, {transform_indices = @transform_7, window_bounds = array<i64: 16, 4>}]} {
    %c0 = arith.constant 0 : index
    %c0_0 = arith.constant 0 : index
    %0 = vector.load %arg1[%c0, %c0_0] : memref<16x4xf32, #tpu.memory_space<vmem>>, vector<16x4xf32>
    %1 = vector.extract_strided_slice %0 {offsets = [0, 0], sizes = [16, 1], strides = [1, 1]} : vector<16x4xf32> to vector<16x1xf32>
    %c0_1 = arith.constant 0 : index
    %c0_2 = arith.constant 0 : index
    %2 = vector.load %arg2[%c0_1, %c0_2] : memref<4x32xf32, #tpu.memory_space<vmem>>, vector<1x32xf32>
    %3 = vector.broadcast %1 : vector<16x1xf32> to vector<16x32xf32>
    %4 = vector.broadcast %2 : vector<1x32xf32> to vector<16x32xf32>
    %5 = arith.mulf %3, %4 : vector<16x32xf32>
    %6 = vector.extract_strided_slice %0 {offsets = [0, 1], sizes = [16, 1], strides = [1, 1]} : vector<16x4xf32> to vector<16x1xf32>
    %c1 = arith.constant 1 : index
    %c0_3 = arith.constant 0 : index
    %7 = vector.load %arg2[%c1, %c0_3] : memref<4x32xf32, #tpu.memory_space<vmem>>, vector<1x32xf32>
    %8 = vector.broadcast %6 : vector<16x1xf32> to vector<16x32xf32>
    %9 = vector.broadcast %7 : vector<1x32xf32> to vector<16x32xf32>
    %10 = arith.mulf %8, %9 : vector<16x32xf32>
    %11 = arith.addf %5, %10 : vector<16x32xf32>
    %12 = vector.extract_strided_slice %0 {offsets = [0, 2], sizes = [16, 1], strides = [1, 1]} : vector<16x4xf32> to vector<16x1xf32>
    %c2 = arith.constant 2 : index
    %c0_4 = arith.constant 0 : index
    %13 = vector.load %arg2[%c2, %c0_4] : memref<4x32xf32, #tpu.memory_space<vmem>>, vector<1x32xf32>
    %14 = vector.broadcast %12 : vector<16x1xf32> to vector<16x32xf32>
    %15 = vector.broadcast %13 : vector<1x32xf32> to vector<16x32xf32>
    %16 = arith.mulf %14, %15 : vector<16x32xf32>
    %17 = arith.addf %11, %16 : vector<16x32xf32>
    %18 = vector.extract_strided_slice %0 {offsets = [0, 3], sizes = [16, 1], strides = [1, 1]} : vector<16x4xf32> to vector<16x1xf32>
    %c3 = arith.constant 3 : index
    %c0_5 = arith.constant 0 : index
    %19 = vector.load %arg2[%c3, %c0_5] : memref<4x32xf32, #tpu.memory_space<vmem>>, vector<1x32xf32>
    %20 = vector.broadcast %18 : vector<16x1xf32> to vector<16x32xf32>
    %21 = vector.broadcast %19 : vector<1x32xf32> to vector<16x32xf32>
    %22 = arith.mulf %20, %21 : vector<16x32xf32>
    %23 = arith.addf %17, %22 : vector<16x32xf32>
    %c0_6 = arith.constant 0 : index
    %c0_7 = arith.constant 0 : index
    %24 = vector.load %arg3[%c0_6, %c0_7] : memref<1x32xf32, #tpu.memory_space<vmem>>, vector<1x32xf32>
    %25 = vector.broadcast %24 : vector<1x32xf32> to vector<16x32xf32>
    %26 = arith.addf %23, %25 : vector<16x32xf32>
    %cst = arith.constant 0.000000e+00 : f32
    %27 = vector.broadcast %cst : f32 to vector<16x32xf32>
    %28 = arith.maximumf %26, %27 : vector<16x32xf32>
    %29 = arith.truncf %28 : vector<16x32xf32> to vector<16x32xbf16>
    %c0_8 = arith.constant 0 : index
    %c0_9 = arith.constant 0 : index
    %30 = vector.load %arg4[%c0_8, %c0_9] : memref<32x32xbf16, #tpu.memory_space<vmem>>, vector<32x32xbf16>
    %cst_10 = arith.constant dense<0.000000e+00> : vector<16x32xf32>
    %31 = tpu.matmul %29, %30, %cst_10 {dimension_numbers = #tpu.dot_dimension_numbers<[1], [0], [0], [1], [0, 0, 1, 1], [], []>} : vector<16x32xbf16>, vector<32x32xbf16>, vector<16x32xf32> -> vector<16x32xf32>
    %c0_11 = arith.constant 0 : index
    %c0_12 = arith.constant 0 : index
    %32 = vector.load %arg5[%c0_11, %c0_12] : memref<1x32xf32, #tpu.memory_space<vmem>>, vector<1x32xf32>
    %33 = vector.broadcast %32 : vector<1x32xf32> to vector<16x32xf32>
    %34 = arith.addf %31, %33 : vector<16x32xf32>
    %cst_13 = arith.constant 0.000000e+00 : f32
    %35 = vector.broadcast %cst_13 : f32 to vector<16x32xf32>
    %36 = arith.maximumf %34, %35 : vector<16x32xf32>
    %37 = tpu.iota {dimensions = array<i32: 1>} : vector<16x4xi32>
    %cst_14 = arith.constant 0.000000e+00 : f32
    %38 = vector.broadcast %cst_14 : f32 to vector<16x4xf32>
    %c0_15 = arith.constant 0 : index
    %c0_16 = arith.constant 0 : index
    %39 = vector.load %arg6[%c0_15, %c0_16] : memref<4x32xf32, #tpu.memory_space<vmem>>, vector<1x32xf32>
    %40 = vector.broadcast %39 : vector<1x32xf32> to vector<16x32xf32>
    %41 = arith.mulf %36, %40 : vector<16x32xf32>
    %cst_17 = arith.constant dense<0.000000e+00> : vector<16xf32>
    %42 = vector.multi_reduction <add>, %41, %cst_17 [1] : vector<16x32xf32> to vector<16xf32>
    %43 = vector.shape_cast %42 : vector<16xf32> to vector<16x1xf32>
    %c0_i32 = arith.constant 0 : i32
    %44 = vector.broadcast %c0_i32 : i32 to vector<16x4xi32>
    %45 = arith.cmpi eq, %37, %44 : vector<16x4xi32>
    %cst_18 = arith.constant 0.000000e+00 : f32
    %46 = vector.shape_cast %43 : vector<16x1xf32> to vector<16x1xf32>
    %47 = vector.broadcast %46 : vector<16x1xf32> to vector<16x4xf32>
    %48 = vector.broadcast %cst_18 : f32 to vector<16x4xf32>
    %49 = arith.select %45, %47, %48 : vector<16x4xi1>, vector<16x4xf32>
    %50 = arith.addf %38, %49 : vector<16x4xf32>
    %c1_19 = arith.constant 1 : index
    %c0_20 = arith.constant 0 : index
    %51 = vector.load %arg6[%c1_19, %c0_20] : memref<4x32xf32, #tpu.memory_space<vmem>>, vector<1x32xf32>
    %52 = vector.broadcast %51 : vector<1x32xf32> to vector<16x32xf32>
    %53 = arith.mulf %36, %52 : vector<16x32xf32>
    %cst_21 = arith.constant dense<0.000000e+00> : vector<16xf32>
    %54 = vector.multi_reduction <add>, %53, %cst_21 [1] : vector<16x32xf32> to vector<16xf32>
    %55 = vector.shape_cast %54 : vector<16xf32> to vector<16x1xf32>
    %c1_i32 = arith.constant 1 : i32
    %56 = vector.broadcast %c1_i32 : i32 to vector<16x4xi32>
    %57 = arith.cmpi eq, %37, %56 : vector<16x4xi32>
    %cst_22 = arith.constant 0.000000e+00 : f32
    %58 = vector.shape_cast %55 : vector<16x1xf32> to vector<16x1xf32>
    %59 = vector.broadcast %58 : vector<16x1xf32> to vector<16x4xf32>
    %60 = vector.broadcast %cst_22 : f32 to vector<16x4xf32>
    %61 = arith.select %57, %59, %60 : vector<16x4xi1>, vector<16x4xf32>
    %62 = arith.addf %50, %61 : vector<16x4xf32>
    %c2_23 = arith.constant 2 : index
    %c0_24 = arith.constant 0 : index
    %63 = vector.load %arg6[%c2_23, %c0_24] : memref<4x32xf32, #tpu.memory_space<vmem>>, vector<1x32xf32>
    %64 = vector.broadcast %63 : vector<1x32xf32> to vector<16x32xf32>
    %65 = arith.mulf %36, %64 : vector<16x32xf32>
    %cst_25 = arith.constant dense<0.000000e+00> : vector<16xf32>
    %66 = vector.multi_reduction <add>, %65, %cst_25 [1] : vector<16x32xf32> to vector<16xf32>
    %67 = vector.shape_cast %66 : vector<16xf32> to vector<16x1xf32>
    %c2_i32 = arith.constant 2 : i32
    %68 = vector.broadcast %c2_i32 : i32 to vector<16x4xi32>
    %69 = arith.cmpi eq, %37, %68 : vector<16x4xi32>
    %cst_26 = arith.constant 0.000000e+00 : f32
    %70 = vector.shape_cast %67 : vector<16x1xf32> to vector<16x1xf32>
    %71 = vector.broadcast %70 : vector<16x1xf32> to vector<16x4xf32>
    %72 = vector.broadcast %cst_26 : f32 to vector<16x4xf32>
    %73 = arith.select %69, %71, %72 : vector<16x4xi1>, vector<16x4xf32>
    %74 = arith.addf %62, %73 : vector<16x4xf32>
    %c3_27 = arith.constant 3 : index
    %c0_28 = arith.constant 0 : index
    %75 = vector.load %arg6[%c3_27, %c0_28] : memref<4x32xf32, #tpu.memory_space<vmem>>, vector<1x32xf32>
    %76 = vector.broadcast %75 : vector<1x32xf32> to vector<16x32xf32>
    %77 = arith.mulf %36, %76 : vector<16x32xf32>
    %cst_29 = arith.constant dense<0.000000e+00> : vector<16xf32>
    %78 = vector.multi_reduction <add>, %77, %cst_29 [1] : vector<16x32xf32> to vector<16xf32>
    %79 = vector.shape_cast %78 : vector<16xf32> to vector<16x1xf32>
    %c3_i32 = arith.constant 3 : i32
    %80 = vector.broadcast %c3_i32 : i32 to vector<16x4xi32>
    %81 = arith.cmpi eq, %37, %80 : vector<16x4xi32>
    %cst_30 = arith.constant 0.000000e+00 : f32
    %82 = vector.shape_cast %79 : vector<16x1xf32> to vector<16x1xf32>
    %83 = vector.broadcast %82 : vector<16x1xf32> to vector<16x4xf32>
    %84 = vector.broadcast %cst_30 : f32 to vector<16x4xf32>
    %85 = arith.select %81, %83, %84 : vector<16x4xi1>, vector<16x4xf32>
    %86 = arith.addf %74, %85 : vector<16x4xf32>
    %c0_31 = arith.constant 0 : index
    %c0_32 = arith.constant 0 : index
    %87 = vector.load %arg7[%c0_31, %c0_32] : memref<1x4xf32, #tpu.memory_space<vmem>>, vector<1x4xf32>
    %88 = vector.broadcast %87 : vector<1x4xf32> to vector<16x4xf32>
    %89 = arith.addf %86, %88 : vector<16x4xf32>
    %c0_33 = arith.constant 0 : index
    %c0_34 = arith.constant 0 : index
    %90 = vector.load %arg8[%c0_33, %c0_34] : memref<16x4xf32, #tpu.memory_space<vmem>>, vector<16x4xf32>
    tpu.vector_store %arg8[%c0_33, %c0_34], %89 {strides = array<i32>} : memref<16x4xf32, #tpu.memory_space<vmem>>, vector<16x4xf32>,
    return
  }
  func.func @transform_0(%arg0: i32) -> (i32, i32) {
    %c0_i32 = arith.constant 0 : i32
    %c0_i32_0 = arith.constant 0 : i32
    return %arg0, %c0_i32 : i32, i32
  }
  func.func @transform_1(%arg0: i32) -> (i32, i32) {
    %c0_i32 = arith.constant 0 : i32
    %c0_i32_0 = arith.constant 0 : i32
    %c0_i32_1 = arith.constant 0 : i32
    return %c0_i32, %c0_i32_0 : i32, i32
  }
  func.func @transform_2(%arg0: i32) -> (i32, i32) {
    %c0_i32 = arith.constant 0 : i32
    %c0_i32_0 = arith.constant 0 : i32
    %c0_i32_1 = arith.constant 0 : i32
    return %c0_i32, %c0_i32_0 : i32, i32
  }
  func.func @transform_3(%arg0: i32) -> (i32, i32) {
    %c0_i32 = arith.constant 0 : i32
    %c0_i32_0 = arith.constant 0 : i32
    %c0_i32_1 = arith.constant 0 : i32
    return %c0_i32, %c0_i32_0 : i32, i32
  }
  func.func @transform_4(%arg0: i32) -> (i32, i32) {
    %c0_i32 = arith.constant 0 : i32
    %c0_i32_0 = arith.constant 0 : i32
    %c0_i32_1 = arith.constant 0 : i32
    return %c0_i32, %c0_i32_0 : i32, i32
  }
  func.func @transform_5(%arg0: i32) -> (i32, i32) {
    %c0_i32 = arith.constant 0 : i32
    %c0_i32_0 = arith.constant 0 : i32
    %c0_i32_1 = arith.constant 0 : i32
    return %c0_i32, %c0_i32_0 : i32, i32
  }
  func.func @transform_6(%arg0: i32) -> (i32, i32) {
    %c0_i32 = arith.constant 0 : i32
    %c0_i32_0 = arith.constant 0 : i32
    %c0_i32_1 = arith.constant 0 : i32
    return %c0_i32, %c0_i32_0 : i32, i32
  }
  func.func @transform_7(%arg0: i32) -> (i32, i32) {
    %c0_i32 = arith.constant 0 : i32
    %c0_i32_0 = arith.constant 0 : i32
    return %arg0, %c0_i32 : i32, i32
  }
}

</mosaic_0001>

<llo_original>
// kernel: score_network_forward.1
$region0: #{score_network_forward.1}
  #allocation0 [shape = 'u32[]', space=smem, size = 0x4, offset = 0x4, fixed_abs, tag = 'smem constant byte address 0x4 - core index']
  #allocation1 [shape = 'u32[144,128]{1,0:T(1,128)}', space=vmem, size = 0x12000, scoped, tag = 'internal scratch']
  %s0 = inlined_call_operand.vmem [shape: f32[16,4], index: 0, kind: input, shape index: {}]
  %s1 = inlined_call_operand.vmem [shape: f32[4,32], index: 1, kind: input, shape index: {}]
  %s2 = inlined_call_operand.vmem [shape: f32[1,32], index: 2, kind: input, shape index: {}]
  %s3 = inlined_call_operand.vmem [shape: bf16[32,32], index: 3, kind: input, shape index: {}]
  %s4 = inlined_call_operand.vmem [shape: f32[1,32], index: 4, kind: input, shape index: {}]
  %s5 = inlined_call_operand.vmem [shape: f32[4,32], index: 5, kind: input, shape index: {}]
  %s6 = inlined_call_operand.vmem [shape: f32[1,4], index: 6, kind: input, shape index: {}]
  %s7 = inlined_call_operand.vmem [shape: f32[16,4], index: 7, kind: output, shape index: {}]
  %s8 = sld [smem:[#allocation0]]
  $region38: #{score_network_forward.1} parent=0
    _
  %s10 = ssub.s32 1, %s8
  %s11 = scalar_select 0, %s10, %s8
  // Predicated region
  $region2: #{score_network_forward.1} parent=0 // pred_check
    _
  $region3: #{score_network_forward.1} parent=0 // pred_check_branch
    %13 = sbr.rel (0) target = $region5
  $region4: #{score_network_forward.1} parent=0 // pred_region
    _
  $region5: #{score_network_forward.1} parent=0 // pred_fallthru
    _
  // Predicated region
  $region6: #{score_network_forward.1} parent=0 // pred_check
    _
  $region7: #{score_network_forward.1} parent=0 // pred_check_branch
    %15 = sbr.rel (0) target = $region9
  $region8: #{score_network_forward.1} parent=0 // pred_region
    _
  $region9: #{score_network_forward.1} parent=0 // pred_fallthru
    _
  // Predicated region
  $region10: #{score_network_forward.1} parent=0 // pred_check
    _
  $region11: #{score_network_forward.1} parent=0 // pred_check_branch
    %17 = sbr.rel (0) target = $region13
  $region12: #{score_network_forward.1} parent=0 // pred_region
    _
  $region13: #{score_network_forward.1} parent=0 // pred_fallthru
    _
  // Predicated region
  $region14: #{score_network_forward.1} parent=0 // pred_check
    _
  $region15: #{score_network_forward.1} parent=0 // pred_check_branch
    %19 = sbr.rel (0) target = $region17
  $region16: #{score_network_forward.1} parent=0 // pred_region
    _
  $region17: #{score_network_forward.1} parent=0 // pred_fallthru
    _
  // Predicated region
  $region18: #{score_network_forward.1} parent=0 // pred_check
    _
  $region19: #{score_network_forward.1} parent=0 // pred_check_branch
    %21 = sbr.rel (0) target = $region21
  $region20: #{score_network_forward.1} parent=0 // pred_region
    _
  $region21: #{score_network_forward.1} parent=0 // pred_fallthru
    _
  // Predicated region
  $region22: #{score_network_forward.1} parent=0 // pred_check
    _
  $region23: #{score_network_forward.1} parent=0 // pred_check_branch
    %23 = sbr.rel (0) target = $region25
  $region24: #{score_network_forward.1} parent=0 // pred_region
    _
  $region25: #{score_network_forward.1} parent=0 // pred_fallthru
    _
  // Predicated region
  $region26: #{score_network_forward.1} parent=0 // pred_check
    _
  $region27: #{score_network_forward.1} parent=0 // pred_check_branch
    %25 = sbr.rel (0) target = $region29
  $region28: #{score_network_forward.1} parent=0 // pred_region
    _
  $region29: #{score_network_forward.1} parent=0 // pred_fallthru
    _
  %v27 = vld [vmem:[%s0] sm:$0xff]
  %v28 = vld [vmem:[%s0 + $0x8] sm:$0xff]
  %v29 = vld [vmem:[%s1] sm:$0x1]
  %31 = vset.pattern.permute.xlu0 0
  %32 = vperm.xlu0 %31, %v27
  %v33 = vpop.permute.xlu0 %32
  %36 = vset.pattern.permute.xlu0 0
  %37 = vperm.xlu0 %36, %v28
  %v38 = vpop.permute.xlu0 %37
  %v40 = vlaneseq
  %v41 = vshrl.u32 %v40, 7
  %v42 = vsub.s32 0, %v41
  %v43 = vrot.slane %v29, %v42
  %v44 = vmul.f32 %v33, %v43
  %v45 = vmul.f32 %v38, %v43
  %v46 = vld [vmem:[%s1 + $0x1] sm:$0x1]
  %47 = vset.pattern.permute.xlu0 1
  %48 = vperm.xlu0 %47, %v27
  %v49 = vpop.permute.xlu0 %48
  %51 = vset.pattern.permute.xlu0 1
  %52 = vperm.xlu0 %51, %v28
  %v53 = vpop.permute.xlu0 %52
  %v55 = vlaneseq
  %v56 = vshrl.u32 %v55, 7
  %v57 = vsub.s32 0, %v56
  %v58 = vrot.slane %v46, %v57
  %v59 = vmul.f32 %v49, %v58
  %v60 = vmul.f32 %v53, %v58
  %v61 = vadd.f32 %v44, %v59
  %v62 = vadd.f32 %v45, %v60
  %v63 = vld [vmem:[%s1 + $0x2] sm:$0x1]
  %64 = vset.pattern.permute.xlu0 2
  %65 = vperm.xlu0 %64, %v27
  %v66 = vpop.permute.xlu0 %65
  %68 = vset.pattern.permute.xlu0 2
  %69 = vperm.xlu0 %68, %v28
  %v70 = vpop.permute.xlu0 %69
  %v72 = vlaneseq
  %v73 = vshrl.u32 %v72, 7
  %v74 = vsub.s32 0, %v73
  %v75 = vrot.slane %v63, %v74
  %v76 = vmul.f32 %v66, %v75
  %v77 = vmul.f32 %v70, %v75
  %v78 = vadd.f32 %v61, %v76
  %v79 = vadd.f32 %v62, %v77
  %v80 = vld [vmem:[%s1 + $0x3] sm:$0x1]
  %81 = vset.pattern.permute.xlu0 3
  %82 = vperm.xlu0 %81, %v27
  %v83 = vpop.permute.xlu0 %82
  %85 = vset.pattern.permute.xlu0 3
  %86 = vperm.xlu0 %85, %v28
  %v87 = vpop.permute.xlu0 %86
  %v89 = vlaneseq
  %v90 = vshrl.u32 %v89, 7
  %v91 = vsub.s32 0, %v90
  %v92 = vrot.slane %v80, %v91
  %v93 = vmul.f32 %v83, %v92
  %v94 = vmul.f32 %v87, %v92
  %v95 = vadd.f32 %v78, %v93
  %v96 = vadd.f32 %v79, %v94
  %v97 = vld [vmem:[%s2] sm:$0x1]
  %v99 = vlaneseq
  %v100 = vshrl.u32 %v99, 7
  %v101 = vsub.s32 0, %v100
  %v102 = vrot.slane %v97, %v101
  %v104 = vadd.f32 %v95, %v102
  %v105 = vadd.f32 %v96, %v102
  %v106 = vmax.f32 %v104, 0.0
  %v107 = vmax.f32 %v105, 0.0
  %v108 = vpack.c.bf16 %v107, %v106
  %v109 = vld [vmem:[%s3] sm:$0xf]
  %v110 = vld [vmem:[%s3 + $0x4] sm:$0xf]
  %v111 = vld [vmem:[%s3 + $0x8] sm:$0xf]
  %v112 = vld [vmem:[%s3 + $0xc] sm:$0xf]
  %v113 = vld [vmem:[%s4] sm:$0x1]
  %v115 = vlaneseq
  %v116 = vshrl.u32 %v115, 7
  %v117 = vsub.s32 0, %v116
  %v118 = vrot.slane %v113, %v117
  %v124 = vunpack.c.l.b16 %v109
  %v125 = vunpack.c.l.b16 %v110
  %v126 = vunpack.c.l.b16 %v111
  %v127 = vunpack.c.l.b16 %v112
  %v128 = vpack.c.b16 %v125, %v124
  %v129 = vpack.c.b16 %v127, %v126
  %vm132 = vcmask 261120
  %v134 = vsel %vm132, %v108, 0
  %136 = vmatprep.subr.bf16.mxu0 0
  %137 = vmatpush1.bf16.msra.mxu0 %v128
  %138 = vmatprep.subr.bf16.mxu0 0
  %139 = vmatpush1.bf16.msra.mxu0 %v129
  %140 = vmatprep.subr.bf16.mxu0 0
  %141 = vmatpush1.bf16.msra.mxu0 0
  %142 = vmatprep.subr.bf16.mxu0 0
  %143 = vmatpush1.bf16.msra.mxu0 0
  %144 = vmatprep.subr.bf16.mxu0 0
  %145 = vmatpush1.bf16.msra.mxu0 0
  %146 = vmatprep.subr.bf16.mxu0 0
  %147 = vmatpush1.bf16.msra.mxu0 0
  %148 = vmatprep.subr.bf16.mxu0 0
  %149 = vmatpush1.bf16.msra.mxu0 0
  %150 = vmatprep.subr.bf16.mxu0 0
  %151 = vmatpush1.bf16.msra.mxu0 0
  %152 = vmatprep.subr.bf16.mxu0 0
  %153 = vmatpush1.bf16.msra.mxu0 0
  %154 = vmatprep.subr.bf16.mxu0 0
  %155 = vmatpush1.bf16.msra.mxu0 0
  %156 = vmatprep.subr.bf16.mxu0 0
  %157 = vmatpush1.bf16.msra.mxu0 0
  %158 = vmatprep.subr.bf16.mxu0 0
  %159 = vmatpush1.bf16.msra.mxu0 0
  %160 = vmatprep.subr.bf16.mxu0 0
  %161 = vmatpush1.bf16.msra.mxu0 0
  %162 = vmatprep.subr.bf16.mxu0 0
  %163 = vmatpush1.bf16.msra.mxu0 0
  %164 = vmatprep.subr.bf16.mxu0 0
  %165 = vmatpush1.bf16.msra.mxu0 0
  %166 = vmatprep.subr.bf16.mxu0 0
  %167 = vmatpush1.bf16.msra.mxu0 0
  %168 = vmatprep.mubr.bf16.mxu0 0
  %169 = vmatmul.mubr.bf16.gmra.mrb[0].mxu0 %v134
  %v170 = vpop.f32.mrb[0].mxu0
  %v171 = vadd.f32 %v118, %v170
  %v172 = vpop.f32.mrb[0].mxu0
  %v173 = vpop.f32.mrb[0].mxu0
  %v174 = vadd.f32 %v118, %v173
  %v175 = vpop.f32.mrb[0].mxu0
  %176 = vdwg.mxu0
  %v177 = vmax.f32 %v171, 0.0
  %v178 = vmax.f32 %v174, 0.0
  %v179 = vlaneseq
  %v180 = vand.u32 %v179, 127
  %v181 = vld [vmem:[%s5] sm:$0x1]
  %v182 = vlaneseq
  %v183 = vshrl.u32 %v182, 7
  %v184 = vsub.s32 0, %v183
  %v185 = vrot.slane %v181, %v184
  %v186 = vmul.f32 %v177, %v185
  %v187 = vmul.f32 %v178, %v185
  %v188 = vsel %vm132, %v186, 0.0
  %189 = vadd.xlane.f32.xlu0 %v188
  %v190 = vpop.xlane.xlu0 %189
  %v191 = vsel %vm132, %v187, 0.0
  %192 = vadd.xlane.f32.xlu0 %v191
  %v193 = vpop.xlane.xlu0 %192
  %vm194 = vcmp.eq.s32.totalorder %v180, 0
  %v195 = vsel %vm194, %v190, 0.0
  %v196 = vsel %vm194, %v193, 0.0
  %v197 = vadd.f32 %v195, 0.0
  %v198 = vadd.f32 %v196, 0.0
  %v199 = vld [vmem:[%s5 + $0x1] sm:$0x1]
  %v200 = vlaneseq
  %v201 = vshrl.u32 %v200, 7
  %v202 = vsub.s32 0, %v201
  %v203 = vrot.slane %v199, %v202
  %v204 = vmul.f32 %v177, %v203
  %v205 = vmul.f32 %v178, %v203
  %v206 = vsel %vm132, %v204, 0.0
  %207 = vadd.xlane.f32.xlu0 %v206
  %v208 = vpop.xlane.xlu0 %207
  %v209 = vsel %vm132, %v205, 0.0
  %210 = vadd.xlane.f32.xlu0 %v209
  %v211 = vpop.xlane.xlu0 %210
  %vm212 = vcmp.eq.s32.totalorder %v180, 1
  %v213 = vsel %vm212, %v208, 0.0
  %v214 = vsel %vm212, %v211, 0.0
  %v215 = vadd.f32 %v197, %v213
  %v216 = vadd.f32 %v198, %v214
  %v217 = vld [vmem:[%s5 + $0x2] sm:$0x1]
  %v218 = vlaneseq
  %v219 = vshrl.u32 %v218, 7
  %v220 = vsub.s32 0, %v219
  %v221 = vrot.slane %v217, %v220
  %v222 = vmul.f32 %v177, %v221
  %v223 = vmul.f32 %v178, %v221
  %v224 = vsel %vm132, %v222, 0.0
  %225 = vadd.xlane.f32.xlu0 %v224
  %v226 = vpop.xlane.xlu0 %225
  %v227 = vsel %vm132, %v223, 0.0
  %228 = vadd.xlane.f32.xlu0 %v227
  %v229 = vpop.xlane.xlu0 %228
  %vm230 = vcmp.eq.s32.totalorder %v180, 2
  %v231 = vsel %vm230, %v226, 0.0
  %v232 = vsel %vm230, %v229, 0.0
  %v233 = vadd.f32 %v215, %v231
  %v234 = vadd.f32 %v216, %v232
  %v235 = vld [vmem:[%s5 + $0x3] sm:$0x1]
  %v236 = vlaneseq
  %v237 = vshrl.u32 %v236, 7
  %v238 = vsub.s32 0, %v237
  %v239 = vrot.slane %v235, %v238
  %v240 = vmul.f32 %v177, %v239
  %v241 = vmul.f32 %v178, %v239
  %v242 = vsel %vm132, %v240, 0.0
  %243 = vadd.xlane.f32.xlu0 %v242
  %v244 = vpop.xlane.xlu0 %243
  %v245 = vsel %vm132, %v241, 0.0
  %246 = vadd.xlane.f32.xlu0 %v245
  %v247 = vpop.xlane.xlu0 %246
  %vm248 = vcmp.eq.s32.totalorder %v180, 3
  %v249 = vsel %vm248, %v244, 0.0
  %v250 = vsel %vm248, %v247, 0.0
  %v251 = vadd.f32 %v233, %v249
  %v252 = vadd.f32 %v234, %v250
  %v253 = vld [vmem:[%s6] sm:$0x1]
  %v255 = vlaneseq
  %v256 = vshrl.u32 %v255, 7
  %v257 = vsub.s32 0, %v256
  %v258 = vrot.slane %v253, %v257
  %v260 = vadd.f32 %v251, %v258
  %v261 = vadd.f32 %v252, %v258
  %vm262 = vcmask 31744
  %263 = vst.msk [vmem:[%s7] sm:$0xff] %vm262, %v260
  %264 = vst.msk [vmem:[%s7 + $0x8] sm:$0xff] %vm262, %v261
  // Predicated region
  $region30: #{score_network_forward.1} parent=0 // pred_check
    _
  $region31: #{score_network_forward.1} parent=0 // pred_check_branch
    %266 = sbr.rel (0) target = $region33
  $region32: #{score_network_forward.1} parent=0 // pred_region
    _
  $region33: #{score_network_forward.1} parent=0 // pred_fallthru
    _
  // Predicated region
  $region34: #{score_network_forward.1} parent=0 // pred_check
    _
  $region35: #{score_network_forward.1} parent=0 // pred_check_branch
    %268 = sbr.rel (0) target = $region37
  $region36: #{score_network_forward.1} parent=0 // pred_region
    _
  $region37: #{score_network_forward.1} parent=0 // pred_fallthru
    _

</llo_original>
